<compile_context>
chip_gen: v7x
topology: tpu7x:2x2x1
jax: 0.10.0
libtpu: 0.0.40
codegen_flags: <defaults>
</compile_context>

<pallas_src>
import jax
import jax.numpy as jnp
import numpy as np
from jax.experimental import pallas as pl
from jax.experimental.pallas import tpu as pltpu


def _round_up(x, m):
    return (x + m - 1) // m * m


def _make_kernel(K, Ci, Co, dilation, has_downsample, compute_dtype):
    """Fused TemporalBlock kernel for one (batch, L-tile) grid step."""

    def kernel(x_ref, w1_ref, b1_ref, w2_ref, b2_ref, *rest):
        if has_downsample:
            bds_ref, out_ref, xprev_ref, h1prev_ref = rest
        else:
            out_ref, xprev_ref, h1prev_ref = rest

        l = pl.program_id(1)

        # New batch element -> causal start: zero the carried halos.
        @pl.when(l == 0)
        def _():
            xprev_ref[...] = jnp.zeros_like(xprev_ref)
            h1prev_ref[...] = jnp.zeros_like(h1prev_ref)

        x = x_ref[0]                                   # (Ci, Lt) f32
        Lt = x.shape[-1]
        x_c = x.astype(compute_dtype)
        # Lane-only iota; sublane broadcast in the selects is free-ish.
        col = jax.lax.broadcasted_iota(jnp.int32, (1, Lt), 1)

        def im2col(cur, prev_ref):
            """Causal dilated im2col of `cur` with halo from the prev tile."""
            prev = prev_ref[...]
            pieces = []
            for k in range(K):
                s = (K - 1 - k) * dilation             # causal shift of tap k
                if s == 0:
                    pieces.append(cur)
                else:
                    rc = pltpu.roll(cur, shift=s, axis=1)    # XLU lane rotate
                    rp = pltpu.roll(prev, shift=s, axis=1)   # halo columns
                    pieces.append(jnp.where(col >= s, rc, rp))
            return jnp.concatenate(pieces, axis=0)     # (K*C, Lt)

        # ---- conv1 (+ fused 1x1 downsample rows): one MXU matmul ------------
        xcol = im2col(x_c, xprev_ref)                  # (K*Ci, Lt)
        a1 = jnp.dot(w1_ref[...], xcol, preferred_element_type=jnp.float32)
        h1 = jnp.maximum(a1[:Co] + b1_ref[...], 0.0)   # (Co, Lt) f32, ReLU
        # Dropout: identity at inference.
        h1_c = h1.astype(compute_dtype)

        # ---- conv2: one MXU matmul, halo carried in h1prev scratch ----------
        h1col = im2col(h1_c, h1prev_ref)               # (K*Co, Lt)
        h2 = jnp.dot(w2_ref[...], h1col, preferred_element_type=jnp.float32)
        h2 = jnp.maximum(h2 + b2_ref[...], 0.0)        # (Co, Lt) f32, ReLU
        # Dropout: identity at inference.

        # ---- residual branch -------------------------------------------------
        if has_downsample:
            res = a1[Co:] + bds_ref[...]               # fused downsample rows
        else:
            res = x                                    # f32 skip (never bf16)

        # Module forward is `out + res` (NO final ReLU).
        out_ref[0] = (h2 + res).astype(out_ref.dtype)

        # ---- carry halos for the next L tile of this batch element ----------
        xprev_ref[...] = x_c
        h1prev_ref[...] = h1_c

    return kernel


def temporal_block_forward(x, w1, b1, w2, b2, wds, bds, *,
                           kernel_size, dilation, padding,
                           use_bf16=False, max_lt=2048):
    """TemporalBlock forward. x: (N, Cin, L) f32 -> (N, Cout, L) f32."""
    N, Cin, L = x.shape
    K, d, pad_amt = kernel_size, dilation, padding
    assert pad_amt == d * (K - 1), "TCN invariant: padding == dilation*(kernel_size-1)"
    Cout = w1.shape[0]
    has_ds = wds is not None
    if not has_ds:
        assert Cin == Cout, "identity residual requires n_inputs == n_outputs"

    cdt = jnp.bfloat16 if use_bf16 else jnp.float32
    cb = 2 if use_bf16 else 4
    align = 16 if use_bf16 else 8            # bf16 packs 16 rows / vreg
    Ci = _round_up(max(Cin, align), align)
    Co = _round_up(max(Cout, align), align)
    mrows = 2 * Co if has_ds else Co         # conv1 LHS rows (downsample fused)

    # ---- pick the lane tile Lt so the per-step working set fits VMEM --------
    per_col = (2 * Ci * 4 + 2 * Co * 4            # dbl-buffered x / out blocks (f32)
               + (Ci + Co) * cb                   # xprev / h1prev scratch
               + (K + 1) * Ci * cb                # xcol + x_c
               + (mrows + 2 * Co) * 4 + Co * cb   # a1, h1, h2/out, h1_c
               + K * Co * cb)                     # h1col
    budget = 20 * 1024 * 1024                     # ~1/3 of v7x's 64 MiB VMEM
    Lt = max(128, (budget // per_col) // 128 * 128)
    Lt = min(Lt, max(128, max_lt))                # v7x-safe cap
    Lt = min(Lt, _round_up(L, 128))               # don't over-tile tiny L
    Lt = max(Lt, _round_up(max(pad_amt, 1), 128)) # halo must fit in one prev tile
    Ltot = _round_up(L, Lt)
    nL = Ltot // Lt

    # x stays f32 in HBM: cast to compute dtype in-kernel; the identity
    # residual reads the f32 block directly (skip connection not quantized).
    xp = jnp.pad(x.astype(jnp.float32), ((0, 0), (0, Ci - Cin), (0, Ltot - L)))

    def conv_weight_cols(w, ci, co):
        # (cout, cin, K) -> (co, k*ci + c), zero-padded channels.
        wp = jnp.pad(w.astype(jnp.float32),
                     ((0, co - w.shape[0]), (0, ci - w.shape[1]), (0, 0)))
        return jnp.transpose(wp, (0, 2, 1)).reshape(co, w.shape[2] * ci)

    w1col = conv_weight_cols(w1, Ci, Co)                    # (Co, K*Ci)
    if has_ds:
        # 1x1 downsample acts on the unshifted tap (shift 0 == tap K-1).
        wds_p = jnp.pad(wds.reshape(Cout, Cin).astype(jnp.float32),
                        ((0, Co - Cout), (0, Ci - Cin)))
        wds_row = jnp.zeros((Co, K * Ci), jnp.float32).at[:, (K - 1) * Ci:].set(wds_p)
        w1s = jnp.concatenate([w1col, wds_row], axis=0)     # (2Co, K*Ci)
    else:
        w1s = w1col
    w1s = w1s.astype(cdt)
    w2col = conv_weight_cols(w2, Co, Co).astype(cdt)        # (Co, K*Co)
    b1c = jnp.pad(b1.astype(jnp.float32), (0, Co - Cout)).reshape(Co, 1)
    b2c = jnp.pad(b2.astype(jnp.float32), (0, Co - Cout)).reshape(Co, 1)

    inputs = [xp, w1s, b1c, w2col, b2c]
    in_specs = [
        pl.BlockSpec((1, Ci, Lt), lambda n, l: (n, 0, l)),
        pl.BlockSpec((mrows, K * Ci), lambda n, l: (0, 0)),
        pl.BlockSpec((Co, 1), lambda n, l: (0, 0)),
        pl.BlockSpec((Co, K * Co), lambda n, l: (0, 0)),
        pl.BlockSpec((Co, 1), lambda n, l: (0, 0)),
    ]
    if has_ds:
        bdsc = jnp.pad(bds.astype(jnp.float32), (0, Co - Cout)).reshape(Co, 1)
        inputs.append(bdsc)
        in_specs.append(pl.BlockSpec((Co, 1), lambda n, l: (0, 0)))

    flops = 2 * N * Ltot * (mrows * K * Ci + Co * K * Co)
    bytes_accessed = (sum(int(np.prod(a.shape)) * a.dtype.itemsize for a in inputs)
                      + N * Co * Ltot * 4)

    kernel = _make_kernel(K, Ci, Co, d, has_ds, cdt)

    vmem_limit = int(min(56 * 1024 * 1024,
                         max(32 * 1024 * 1024,
                             2 * per_col * Lt + 4 * 1024 * 1024)))

    out = pl.pallas_call(
        kernel,
        out_shape=jax.ShapeDtypeStruct((N, Co, Ltot), jnp.float32),
        grid_spec=pltpu.PrefetchScalarGridSpec(
            num_scalar_prefetch=0,
            grid=(N, nL),
            in_specs=in_specs,
            out_specs=pl.BlockSpec((1, Co, Lt), lambda n, l: (n, 0, l)),
            scratch_shapes=[pltpu.VMEM((Ci, Lt), cdt),    # previous x tile
                            pltpu.VMEM((Co, Lt), cdt)],   # previous h1 tile
        ),
        compiler_params=pltpu.CompilerParams(
            dimension_semantics=("parallel", "arbitrary"),
            vmem_limit_bytes=vmem_limit),
        cost_estimate=pl.CostEstimate(flops=flops, transcendentals=0,
                                      bytes_accessed=bytes_accessed),
    )(*inputs)

    if Co == Cout and Ltot == L:
        return out
    return out[:, :Cout, :L]


def _weight_norm(v, g):
    """Effective weight of torch.nn.utils.weight_norm (dim=0 default)."""
    norm = jnp.sqrt(jnp.sum(v * v, axis=(1, 2), keepdims=True))
    return g * v / norm


def _reference(x, w1, b1, w2, b2, wds, bds, *, dilation, padding):
    """Independent pure-JAX reference using lax.conv_general_dilated."""
    dn = ("NCH", "OIH", "NCH")

    def conv(inp, w, b):
        y = jax.lax.conv_general_dilated(
            inp, w, window_strides=(1,), padding=[(padding, padding)],
            rhs_dilation=(dilation,), dimension_numbers=dn,
            precision=jax.lax.Precision.HIGHEST)
        y = y[:, :, :-padding] if padding > 0 else y          # Chomp1d
        return jnp.maximum(y + b[None, :, None], 0.0)          # ReLU

    out = conv(conv(x, w1, b1), w2, b2)
    if wds is not None:
        res = jax.lax.conv_general_dilated(
            x, wds, window_strides=(1,), padding=[(0, 0)],
            dimension_numbers=dn,
            precision=jax.lax.Precision.HIGHEST) + bds[None, :, None]
    else:
        res = x
    return out + res          # no final ReLU in this module's forward


if __name__ == "__main__":
    N, Cin, Cout, L = 2, 4, 8, 16
    K, dilation = 3, 2
    padding = (K - 1) * dilation  # standard TCN causal padding = 4

    key = jax.random.PRNGKey(0)
    ks = jax.random.split(key, 12)

    # weight_norm parameterization (v, g) for conv1 / conv2
    v1 = jax.random.normal(ks[0], (Cout, Cin, K), jnp.float32) * 0.01
    g1 = jnp.abs(jax.random.normal(ks[1], (Cout, 1, 1), jnp.float32)) + 0.5
    w1 = _weight_norm(v1, g1)
    b1 = jax.random.normal(ks[2], (Cout,), jnp.float32) * 0.1

    v2 = jax.random.normal(ks[3], (Cout, Cout, K), jnp.float32) * 0.01
    g2 = jnp.abs(jax.random.normal(ks[4], (Cout, 1, 1), jnp.float32)) + 0.5
    w2 = _weight_norm(v2, g2)
    b2 = jax.random.normal(ks[5], (Cout,), jnp.float32) * 0.1

    # downsample 1x1 conv (exists because Cin != Cout)
    wds = jax.random.normal(ks[6], (Cout, Cin, 1), jnp.float32) * 0.01
    bds = jax.random.normal(ks[7], (Cout,), jnp.float32) * 0.1

    x = jax.random.normal(ks[8], (N, Cin, L), jnp.float32)

    # --- f32 path, downsample residual (Cin != Cout), single L tile ----------
    out = jax.block_until_ready(temporal_block_forward(
        x, w1, b1, w2, b2, wds, bds,
        kernel_size=K, dilation=dilation, padding=padding))
    ref = _reference(x, w1, b1, w2, b2, wds, bds,
                     dilation=dilation, padding=padding)
    np.testing.assert_allclose(np.asarray(out), np.asarray(ref),
                               rtol=1e-4, atol=1e-4)

    # --- bf16 matmul operands (f32 accumulation / f32 residual) --------------
    out_bf16 = jax.block_until_ready(temporal_block_forward(
        x, w1, b1, w2, b2, wds, bds,
        kernel_size=K, dilation=dilation, padding=padding, use_bf16=True))
    np.testing.assert_allclose(np.asarray(out_bf16), np.asarray(ref),
                               rtol=1e-1, atol=1e-1)

    # --- identity residual path (Cin == Cout -> no downsample args/DMAs) -----
    v1b = jax.random.normal(ks[9], (Cout, Cout, K), jnp.float32) * 0.01
    w1b = _weight_norm(v1b, g1)
    x2 = jax.random.normal(ks[10], (N, Cout, L), jnp.float32)
    out2 = jax.block_until_ready(temporal_block_forward(
        x2, w1b, b1, w2, b2, None, None,
        kernel_size=K, dilation=dilation, padding=padding))
    ref2 = _reference(x2, w1b, b1, w2, b2, None, None,
                      dilation=dilation, padding=padding)
    np.testing.assert_allclose(np.asarray(out2), np.asarray(ref2),
                               rtol=1e-4, atol=1e-4)

    # --- multi L-tile path (forces Lt=128 -> 3 tiles) to exercise halo carry -
    L3 = 300
    x3 = jax.random.normal(ks[11], (N, Cin, L3), jnp.float32)
    out3 = jax.block_until_ready(temporal_block_forward(
        x3, w1, b1, w2, b2, wds, bds,
        kernel_size=K, dilation=dilation, padding=padding, max_lt=128))
    ref3 = _reference(x3, w1, b1, w2, b2, wds, bds,
                      dilation=dilation, padding=padding)
    np.testing.assert_allclose(np.asarray(out3), np.asarray(ref3),
                               rtol=1e-4, atol=1e-4)

    print("KERNEL_OK")
</pallas_src>

<mosaic_0001>
module attributes {stable_mosaic.version = 11 : i64} {
  func.func @kernel(%arg0: i32, %arg1: i32, %arg2: memref<1x8x128xf32, #tpu.memory_space<vmem>>, %arg3: memref<16x24xf32, #tpu.memory_space<vmem>>, %arg4: memref<8x1xf32, #tpu.memory_space<vmem>>, %arg5: memref<8x24xf32, #tpu.memory_space<vmem>>, %arg6: memref<8x1xf32, #tpu.memory_space<vmem>>, %arg7: memref<8x1xf32, #tpu.memory_space<vmem>>, %arg8: memref<1x8x128xf32, #tpu.memory_space<vmem>>, %arg9: memref<8x128xf32, #tpu.memory_space<vmem>>, %arg10: memref<8x128xf32, #tpu.memory_space<vmem>>) attributes {dimension_semantics = [#tpu.dimension_semantics<parallel>, #tpu.dimension_semantics<arbitrary>], iteration_bounds = array<i64: 2, 1>, scalar_prefetch = 0 : i64, scratch_operands = 2 : i64, tpu.core_type = #tpu.core_type<tc>, window_params = [{transform_indices = @transform_0, window_bounds = array<i64: 1, 8, 128>}, {pipeline_mode = #tpu.pipeline_mode<synchronous>, transform_indices = @transform_1, window_bounds = array<i64: 16, 24>}, {pipeline_mode = #tpu.pipeline_mode<synchronous>, transform_indices = @transform_2, window_bounds = array<i64: 8, 1>}, {pipeline_mode = #tpu.pipeline_mode<synchronous>, transform_indices = @transform_3, window_bounds = array<i64: 8, 24>}, {pipeline_mode = #tpu.pipeline_mode<synchronous>, transform_indices = @transform_4, window_bounds = array<i64: 8, 1>}, {pipeline_mode = #tpu.pipeline_mode<synchronous>, transform_indices = @transform_5, window_bounds = array<i64: 8, 1>}, {transform_indices = @transform_6, window_bounds = array<i64: 1, 8, 128>}]} {
    %c0_i32 = arith.constant 0 : i32
    %0 = arith.cmpi eq, %arg1, %c0_i32 : i32
    %1 = arith.extui %0 : i1 to i32
    %c0_i32_0 = arith.constant 0 : i32
    %2 = arith.cmpi ne, %1, %c0_i32_0 : i32
    scf.if %2 {
      %cst_37 = arith.constant 0.000000e+00 : f32
      %63 = vector.broadcast %cst_37 : f32 to vector<8x128xf32>
      %c0_38 = arith.constant 0 : index
      %c0_39 = arith.constant 0 : index
      %64 = vector.load %arg9[%c0_38, %c0_39] : memref<8x128xf32, #tpu.memory_space<vmem>>, vector<8x128xf32>
      tpu.vector_store %arg9[%c0_38, %c0_39], %63 {strides = array<i32>} : memref<8x128xf32, #tpu.memory_space<vmem>>, vector<8x128xf32>,
      %cst_40 = arith.constant 0.000000e+00 : f32
      %65 = vector.broadcast %cst_40 : f32 to vector<8x128xf32>
      %c0_41 = arith.constant 0 : index
      %c0_42 = arith.constant 0 : index
      %66 = vector.load %arg10[%c0_41, %c0_42] : memref<8x128xf32, #tpu.memory_space<vmem>>, vector<8x128xf32>
      tpu.vector_store %arg10[%c0_41, %c0_42], %65 {strides = array<i32>} : memref<8x128xf32, #tpu.memory_space<vmem>>, vector<8x128xf32>,
    } else {
    }
    %c0 = arith.constant 0 : index
    %c0_1 = arith.constant 0 : index
    %c0_2 = arith.constant 0 : index
    %3 = vector.load %arg2[%c0, %c0_1, %c0_2] : memref<1x8x128xf32, #tpu.memory_space<vmem>>, vector<1x8x128xf32>
    %4 = vector.shape_cast %3 : vector<1x8x128xf32> to vector<8x128xf32>
    %5 = tpu.iota {dimensions = array<i32: 1>} : vector<1x128xi32>
    %c0_3 = arith.constant 0 : index
    %c0_4 = arith.constant 0 : index
    %6 = vector.load %arg9[%c0_3, %c0_4] : memref<8x128xf32, #tpu.memory_space<vmem>>, vector<8x128xf32>
    %c4_i32 = arith.constant 4 : i32
    %7 = tpu.dynamic_rotate %4 by %c4_i32 dim 1 : vector<8x128xf32>, i32 -> vector<8x128xf32>
    %c4_i32_5 = arith.constant 4 : i32
    %8 = tpu.dynamic_rotate %6 by %c4_i32_5 dim 1 : vector<8x128xf32>, i32 -> vector<8x128xf32>
    %c4_i32_6 = arith.constant 4 : i32
    %9 = vector.broadcast %c4_i32_6 : i32 to vector<1x128xi32>
    %10 = arith.cmpi sge, %5, %9 : vector<1x128xi32>
    %11 = vector.shape_cast %10 : vector<1x128xi1> to vector<1x128xi1>
    %12 = vector.broadcast %11 : vector<1x128xi1> to vector<8x128xi1>
    %13 = arith.select %12, %7, %8 : vector<8x128xi1>, vector<8x128xf32>
    %c2_i32 = arith.constant 2 : i32
    %14 = tpu.dynamic_rotate %4 by %c2_i32 dim 1 : vector<8x128xf32>, i32 -> vector<8x128xf32>
    %c2_i32_7 = arith.constant 2 : i32
    %15 = tpu.dynamic_rotate %6 by %c2_i32_7 dim 1 : vector<8x128xf32>, i32 -> vector<8x128xf32>
    %c2_i32_8 = arith.constant 2 : i32
    %16 = vector.broadcast %c2_i32_8 : i32 to vector<1x128xi32>
    %17 = arith.cmpi sge, %5, %16 : vector<1x128xi32>
    %18 = vector.shape_cast %17 : vector<1x128xi1> to vector<1x128xi1>
    %19 = vector.broadcast %18 : vector<1x128xi1> to vector<8x128xi1>
    %20 = arith.select %19, %14, %15 : vector<8x128xi1>, vector<8x128xf32>
    %21 = tpu.concatenate %13, %20, %4 in 0 : vector<8x128xf32>, vector<8x128xf32>, vector<8x128xf32> -> vector<24x128xf32>
    %c0_9 = arith.constant 0 : index
    %c0_10 = arith.constant 0 : index
    %22 = vector.load %arg3[%c0_9, %c0_10] : memref<16x24xf32, #tpu.memory_space<vmem>>, vector<16x24xf32>
    %cst = arith.constant dense<0.000000e+00> : vector<16x128xf32>
    %23 = tpu.matmul %22, %21, %cst {dimension_numbers = #tpu.dot_dimension_numbers<[1], [0], [0], [1], [0, 0, 1, 1], [], []>} : vector<16x24xf32>, vector<24x128xf32>, vector<16x128xf32> -> vector<16x128xf32>
    %24 = vector.extract_strided_slice %23 {offsets = [0, 0], sizes = [8, 128], strides = [1, 1]} : vector<16x128xf32> to vector<8x128xf32>
    %c0_11 = arith.constant 0 : index
    %c0_12 = arith.constant 0 : index
    %25 = vector.load %arg4[%c0_11, %c0_12] : memref<8x1xf32, #tpu.memory_space<vmem>>, vector<8x1xf32>
    %26 = vector.broadcast %25 : vector<8x1xf32> to vector<8x128xf32>
    %27 = arith.addf %24, %26 : vector<8x128xf32>
    %cst_13 = arith.constant 0.000000e+00 : f32
    %28 = vector.broadcast %cst_13 : f32 to vector<8x128xf32>
    %29 = arith.maximumf %27, %28 : vector<8x128xf32>
    %c0_14 = arith.constant 0 : index
    %c0_15 = arith.constant 0 : index
    %30 = vector.load %arg10[%c0_14, %c0_15] : memref<8x128xf32, #tpu.memory_space<vmem>>, vector<8x128xf32>
    %c4_i32_16 = arith.constant 4 : i32
    %31 = tpu.dynamic_rotate %29 by %c4_i32_16 dim 1 : vector<8x128xf32>, i32 -> vector<8x128xf32>
    %c4_i32_17 = arith.constant 4 : i32
    %32 = tpu.dynamic_rotate %30 by %c4_i32_17 dim 1 : vector<8x128xf32>, i32 -> vector<8x128xf32>
    %c4_i32_18 = arith.constant 4 : i32
    %33 = vector.broadcast %c4_i32_18 : i32 to vector<1x128xi32>
    %34 = arith.cmpi sge, %5, %33 : vector<1x128xi32>
    %35 = vector.shape_cast %34 : vector<1x128xi1> to vector<1x128xi1>
    %36 = vector.broadcast %35 : vector<1x128xi1> to vector<8x128xi1>
    %37 = arith.select %36, %31, %32 : vector<8x128xi1>, vector<8x128xf32>
    %c2_i32_19 = arith.constant 2 : i32
    %38 = tpu.dynamic_rotate %29 by %c2_i32_19 dim 1 : vector<8x128xf32>, i32 -> vector<8x128xf32>
    %c2_i32_20 = arith.constant 2 : i32
    %39 = tpu.dynamic_rotate %30 by %c2_i32_20 dim 1 : vector<8x128xf32>, i32 -> vector<8x128xf32>
    %c2_i32_21 = arith.constant 2 : i32
    %40 = vector.broadcast %c2_i32_21 : i32 to vector<1x128xi32>
    %41 = arith.cmpi sge, %5, %40 : vector<1x128xi32>
    %42 = vector.shape_cast %41 : vector<1x128xi1> to vector<1x128xi1>
    %43 = vector.broadcast %42 : vector<1x128xi1> to vector<8x128xi1>
    %44 = arith.select %43, %38, %39 : vector<8x128xi1>, vector<8x128xf32>
    %45 = tpu.concatenate %37, %44, %29 in 0 : vector<8x128xf32>, vector<8x128xf32>, vector<8x128xf32> -> vector<24x128xf32>
    %c0_22 = arith.constant 0 : index
    %c0_23 = arith.constant 0 : index
    %46 = vector.load %arg5[%c0_22, %c0_23] : memref<8x24xf32, #tpu.memory_space<vmem>>, vector<8x24xf32>
    %cst_24 = arith.constant dense<0.000000e+00> : vector<8x128xf32>
    %47 = tpu.matmul %46, %45, %cst_24 {dimension_numbers = #tpu.dot_dimension_numbers<[1], [0], [0], [1], [0, 0, 1, 1], [], []>} : vector<8x24xf32>, vector<24x128xf32>, vector<8x128xf32> -> vector<8x128xf32>
    %c0_25 = arith.constant 0 : index
    %c0_26 = arith.constant 0 : index
    %48 = vector.load %arg6[%c0_25, %c0_26] : memref<8x1xf32, #tpu.memory_space<vmem>>, vector<8x1xf32>
    %49 = vector.broadcast %48 : vector<8x1xf32> to vector<8x128xf32>
    %50 = arith.addf %47, %49 : vector<8x128xf32>
    %cst_27 = arith.constant 0.000000e+00 : f32
    %51 = vector.broadcast %cst_27 : f32 to vector<8x128xf32>
    %52 = arith.maximumf %50, %51 : vector<8x128xf32>
    %53 = vector.extract_strided_slice %23 {offsets = [8, 0], sizes = [8, 128], strides = [1, 1]} : vector<16x128xf32> to vector<8x128xf32>
    %c0_28 = arith.constant 0 : index
    %c0_29 = arith.constant 0 : index
    %54 = vector.load %arg7[%c0_28, %c0_29] : memref<8x1xf32, #tpu.memory_space<vmem>>, vector<8x1xf32>
    %55 = vector.broadcast %54 : vector<8x1xf32> to vector<8x128xf32>
    %56 = arith.addf %53, %55 : vector<8x128xf32>
    %57 = arith.addf %52, %56 : vector<8x128xf32>
    %c0_30 = arith.constant 0 : index
    %c0_31 = arith.constant 0 : index
    %c0_32 = arith.constant 0 : index
    %58 = vector.load %arg8[%c0_30, %c0_31, %c0_32] : memref<1x8x128xf32, #tpu.memory_space<vmem>>, vector<1x8x128xf32>
    %59 = vector.shape_cast %58 : vector<1x8x128xf32> to vector<8x128xf32>
    %60 = vector.shape_cast %57 : vector<8x128xf32> to vector<1x8x128xf32>
    tpu.vector_store %arg8[%c0_30, %c0_31, %c0_32], %60 {strides = array<i32>} : memref<1x8x128xf32, #tpu.memory_space<vmem>>, vector<1x8x128xf32>,
    %c0_33 = arith.constant 0 : index
    %c0_34 = arith.constant 0 : index
    %61 = vector.load %arg9[%c0_33, %c0_34] : memref<8x128xf32, #tpu.memory_space<vmem>>, vector<8x128xf32>
    tpu.vector_store %arg9[%c0_33, %c0_34], %4 {strides = array<i32>} : memref<8x128xf32, #tpu.memory_space<vmem>>, vector<8x128xf32>,
    %c0_35 = arith.constant 0 : index
    %c0_36 = arith.constant 0 : index
    %62 = vector.load %arg10[%c0_35, %c0_36] : memref<8x128xf32, #tpu.memory_space<vmem>>, vector<8x128xf32>
    tpu.vector_store %arg10[%c0_35, %c0_36], %29 {strides = array<i32>} : memref<8x128xf32, #tpu.memory_space<vmem>>, vector<8x128xf32>,
    return
  }
  func.func @transform_0(%arg0: i32, %arg1: i32) -> (i32, i32, i32) {
    %c0_i32 = arith.constant 0 : i32
    %c0_i32_0 = arith.constant 0 : i32
    return %arg0, %c0_i32, %arg1 : i32, i32, i32
  }
  func.func @transform_1(%arg0: i32, %arg1: i32) -> (i32, i32) {
    %c0_i32 = arith.constant 0 : i32
    %c0_i32_0 = arith.constant 0 : i32
    %c0_i32_1 = arith.constant 0 : i32
    return %c0_i32, %c0_i32_0 : i32, i32
  }
  func.func @transform_2(%arg0: i32, %arg1: i32) -> (i32, i32) {
    %c0_i32 = arith.constant 0 : i32
    %c0_i32_0 = arith.constant 0 : i32
    %c0_i32_1 = arith.constant 0 : i32
    return %c0_i32, %c0_i32_0 : i32, i32
  }
  func.func @transform_3(%arg0: i32, %arg1: i32) -> (i32, i32) {
    %c0_i32 = arith.constant 0 : i32
    %c0_i32_0 = arith.constant 0 : i32
    %c0_i32_1 = arith.constant 0 : i32
    return %c0_i32, %c0_i32_0 : i32, i32
  }
  func.func @transform_4(%arg0: i32, %arg1: i32) -> (i32, i32) {
    %c0_i32 = arith.constant 0 : i32
    %c0_i32_0 = arith.constant 0 : i32
    %c0_i32_1 = arith.constant 0 : i32
    return %c0_i32, %c0_i32_0 : i32, i32
  }
  func.func @transform_5(%arg0: i32, %arg1: i32) -> (i32, i32) {
    %c0_i32 = arith.constant 0 : i32
    %c0_i32_0 = arith.constant 0 : i32
    %c0_i32_1 = arith.constant 0 : i32
    return %c0_i32, %c0_i32_0 : i32, i32
  }
  func.func @transform_6(%arg0: i32, %arg1: i32) -> (i32, i32, i32) {
    %c0_i32 = arith.constant 0 : i32
    %c0_i32_0 = arith.constant 0 : i32
    return %arg0, %c0_i32, %arg1 : i32, i32, i32
  }
}

</mosaic_0001>

<llo_original>
// kernel: tpu_custom_call.1
$region0: #{tpu_custom_call.1}
  #allocation0 [shape = 'u32[]', space=smem, size = 0x4, offset = 0x4, fixed_abs, tag = 'smem constant byte address 0x4 - core index']
  #allocation1 [shape = 'u32[144,128]{1,0:T(1,128)}', space=vmem, size = 0x12000, scoped, tag = 'internal scratch']
  #allocation2 [shape = 'f32[8,128]{1,0:T(8,128)}', space=vmem, size = 0x1000, scoped, tag = 'scratch operand']
  #allocation3 [shape = 'f32[8,128]{1,0:T(8,128)}', space=vmem, size = 0x1000, scoped, tag = 'scratch operand']
  %s0 = inlined_call_operand.vmem [shape: f32[2,8,128], index: 0, kind: input, shape index: {}]
  %s1 = inlined_call_operand.hbm [shape: f32[16,24], index: 1, kind: input, shape index: {}]
  %s2 = inlined_call_operand.vmem [shape: f32[8,1], index: 2, kind: input, shape index: {}]
  %s3 = inlined_call_operand.vmem [shape: f32[8,24], index: 3, kind: input, shape index: {}]
  %s4 = inlined_call_operand.vmem [shape: f32[8,1], index: 4, kind: input, shape index: {}]
  %s5 = inlined_call_operand.vmem [shape: f32[8,1], index: 5, kind: input, shape index: {}]
  %s6 = inlined_call_operand.hbm [shape: f32[2,8,128], index: 6, kind: output, shape index: {}]
  %s7 = sld [smem:[#allocation0]]
  $region65: #{tpu_custom_call.1} parent=0
    _
  %s9 = ssub.s32 1, %s7
  %s10 = scalar_select 0, %s9, %s7
  $region1: #{tpu_custom_call.1} parent=0
    #allocation4 [shape = 'u8[8192]{0}', space=vmem, size = 0x2000, scoped, tag = 'input window, operand 1, single buffered']
    #allocation5 [shape = 's32[2]{0}', space=sflag, size = 0x8, scoped, tag = 'scoped memory for tpu_custom_call.1']
    #allocation6 [shape = 's32[2]{0}', space=sflag, size = 0x8, scoped, tag = 'scoped memory for tpu_custom_call.1']
    #allocation7 [shape = 'u8[8192]{0}', space=vmem, size = 0x2000, scoped, tag = 'output window, operand 0']
    %11 = vsyncpa [#allocation5], 0
    %12 = vsyncpa [#allocation6], 0
    %s13 = scalar_lea.sflag [#allocation6], 1
    %14 = vsyncpa %s13, 0
    loop: start=0, step=1, limit=4
    $region2: #{tpu_custom_call.1} parent=1 // loop_pre_header
      _
    $region3: #{tpu_custom_call.1} parent=1 // loop_header
      %s16 = sphi 0, %s20
      %p17 = scmp.ge.s32.totalorder %s16, 4
      %s23 = sphi 0, %s35
      %s24 = sphi 0, %s31
      %s25 = sphi 0, %s23
      %s26 = sphi 0, %s24
      %s27 = sphi 0, %s25
      %s28 = sphi 0, %s26
      %s40 = sphi 0, %s42
      %s43 = sphi 0, %s40
      %s44 = sphi 0, %s43
      %s60 = sphi 0, %s44
      %s64 = sphi 0, %s64
      %s66 = sphi 0, %s64
      %s67 = sphi 0, %s66
      %s81 = sphi 0, %s67
      %s85 = sphi 0, %s85
      %s87 = sphi 0, %s85
      %s88 = sphi 0, %s87
      %s102 = sphi 0, %s88
      %s106 = sphi 0, %s106
      %s108 = sphi 0, %s106
      %s109 = sphi 0, %s108
      %s123 = sphi 0, %s109
      %s127 = sphi 0, %s127
      %s129 = sphi 0, %s127
      %s130 = sphi 0, %s129
      %s144 = sphi 0, %s130
      %s148 = sphi 0, %s148
      %s150 = sphi 0, %s148
      %s151 = sphi 0, %s150
      %s165 = sphi 0, %s151
      %s173 = sphi 0, %s175
      %s176 = sphi 0, %s173
      %s177 = sphi 0, %s176
      %s193 = sphi 0, %s177
    $region4: #{tpu_custom_call.1} parent=1 // loop_header_branch
      %19 = sbr.rel (%p17) target = $region8
    $region5: #{tpu_custom_call.1} parent=1 // loop_body
      %s21 = ssub.s32 %s16, 1
      %s22 = ssub.s32 %s16, 2
      %s29 = sadd.s32 1, %s24
      %p30 = scmp.ge.s32.totalorder %s29, 1
      %s31 = scalar_select %p30, 0, %s29
      %s32 = sadd.s32 1, %s23
      %s33 = scalar_select %p30, %s32, %s23
      %p34 = scmp.ge.s32.totalorder %s33, 2
      %s35 = scalar_select %p34, 0, %s33
      %s36 = ssub.s32 %s23, %s35
      %s37 = ssub.s32 %s24, %s31
      %s38 = sor.u32 %s36, %s37
      %p39 = scmp.eq.s32.totalorder %s38, 0
      %s41 = sadd.s32 %s40, 1
      %s42 = scalar_select %p39, %s40, %s41
      %p45 = pneg %p39
      %p46 = scmp.eq.s32.totalorder %s16, 1
      %p47 = por %p45, %p46
      %p48 = scmp.ne.s32.totalorder %s40, %s43
      %p49 = scmp.eq.s32.totalorder %s16, 0
      %p50 = por %p48, %p49
      %p51 = scmp.ne.s32.totalorder %s40, %s43
      %p52 = scmp.eq.s32.totalorder %s21, 1
      %p53 = por %p51, %p52
      %p54 = scmp.ne.s32.totalorder %s43, %s44
      %p55 = scmp.eq.s32.totalorder %s21, 0
      %p56 = por %p54, %p55
      %p57 = scmp.ne.s32.totalorder %s43, %s44
      %p58 = scmp.eq.s32.totalorder %s22, 1
      %p59 = por %p57, %p58
      %p61 = scmp.ne.s32.totalorder %s44, %s60
      %p62 = scmp.eq.s32.totalorder %s22, 0
      %p63 = por %p61, %p62
      %s65 = sadd.s32 %s64, 1
      %p68 = scmp.eq.s32.totalorder %s16, 1
      %p69 = scmp.ne.s32.totalorder %s64, %s66
      %p70 = scmp.eq.s32.totalorder %s16, 0
      %p71 = por %p69, %p70
      %p72 = scmp.ne.s32.totalorder %s64, %s66
      %p73 = scmp.eq.s32.totalorder %s21, 1
      %p74 = por %p72, %p73
      %p75 = scmp.ne.s32.totalorder %s66, %s67
      %p76 = scmp.eq.s32.totalorder %s21, 0
      %p77 = por %p75, %p76
      %p78 = scmp.ne.s32.totalorder %s66, %s67
      %p79 = scmp.eq.s32.totalorder %s22, 1
      %p80 = por %p78, %p79
      %p82 = scmp.ne.s32.totalorder %s67, %s81
      %p83 = scmp.eq.s32.totalorder %s22, 0
      %p84 = por %p82, %p83
      %s86 = sadd.s32 %s85, 1
      %p89 = scmp.eq.s32.totalorder %s16, 1
      %p90 = scmp.ne.s32.totalorder %s85, %s87
      %p91 = scmp.eq.s32.totalorder %s16, 0
      %p92 = por %p90, %p91
      %p93 = scmp.ne.s32.totalorder %s85, %s87
      %p94 = scmp.eq.s32.totalorder %s21, 1
      %p95 = por %p93, %p94
      %p96 = scmp.ne.s32.totalorder %s87, %s88
      %p97 = scmp.eq.s32.totalorder %s21, 0
      %p98 = por %p96, %p97
      %p99 = scmp.ne.s32.totalorder %s87, %s88
      %p100 = scmp.eq.s32.totalorder %s22, 1
      %p101 = por %p99, %p100
      %p103 = scmp.ne.s32.totalorder %s88, %s102
      %p104 = scmp.eq.s32.totalorder %s22, 0
      %p105 = por %p103, %p104
      %s107 = sadd.s32 %s106, 1
      %p110 = scmp.eq.s32.totalorder %s16, 1
      %p111 = scmp.ne.s32.totalorder %s106, %s108
      %p112 = scmp.eq.s32.totalorder %s16, 0
      %p113 = por %p111, %p112
      %p114 = scmp.ne.s32.totalorder %s106, %s108
      %p115 = scmp.eq.s32.totalorder %s21, 1
      %p116 = por %p114, %p115
      %p117 = scmp.ne.s32.totalorder %s108, %s109
      %p118 = scmp.eq.s32.totalorder %s21, 0
      %p119 = por %p117, %p118
      %p120 = scmp.ne.s32.totalorder %s108, %s109
      %p121 = scmp.eq.s32.totalorder %s22, 1
      %p122 = por %p120, %p121
      %p124 = scmp.ne.s32.totalorder %s109, %s123
      %p125 = scmp.eq.s32.totalorder %s22, 0
      %p126 = por %p124, %p125
      %s128 = sadd.s32 %s127, 1
      %p131 = scmp.eq.s32.totalorder %s16, 1
      %p132 = scmp.ne.s32.totalorder %s127, %s129
      %p133 = scmp.eq.s32.totalorder %s16, 0
      %p134 = por %p132, %p133
      %p135 = scmp.ne.s32.totalorder %s127, %s129
      %p136 = scmp.eq.s32.totalorder %s21, 1
      %p137 = por %p135, %p136
      %p138 = scmp.ne.s32.totalorder %s129, %s130
      %p139 = scmp.eq.s32.totalorder %s21, 0
      %p140 = por %p138, %p139
      %p141 = scmp.ne.s32.totalorder %s129, %s130
      %p142 = scmp.eq.s32.totalorder %s22, 1
      %p143 = por %p141, %p142
      %p145 = scmp.ne.s32.totalorder %s130, %s144
      %p146 = scmp.eq.s32.totalorder %s22, 0
      %p147 = por %p145, %p146
      %s149 = sadd.s32 %s148, 1
      %p152 = scmp.eq.s32.totalorder %s16, 1
      %p153 = scmp.ne.s32.totalorder %s148, %s150
      %p154 = scmp.eq.s32.totalorder %s16, 0
      %p155 = por %p153, %p154
      %p156 = scmp.ne.s32.totalorder %s148, %s150
      %p157 = scmp.eq.s32.totalorder %s21, 1
      %p158 = por %p156, %p157
      %p159 = scmp.ne.s32.totalorder %s150, %s151
      %p160 = scmp.eq.s32.totalorder %s21, 0
      %p161 = por %p159, %p160
      %p162 = scmp.ne.s32.totalorder %s150, %s151
      %p163 = scmp.eq.s32.totalorder %s22, 1
      %p164 = por %p162, %p163
      %p166 = scmp.ne.s32.totalorder %s151, %s165
      %p167 = scmp.eq.s32.totalorder %s22, 0
      %p168 = por %p166, %p167
      %s169 = ssub.s32 %s23, %s35
      %s170 = ssub.s32 %s24, %s31
      %s171 = sor.u32 %s169, %s170
      %p172 = scmp.eq.s32.totalorder %s171, 0
      %s174 = sadd.s32 %s173, 1
      %s175 = scalar_select %p172, %s173, %s174
      %p178 = pneg %p172
      %p179 = scmp.eq.s32.totalorder %s16, 1
      %p180 = por %p178, %p179
      %p181 = scmp.ne.s32.totalorder %s173, %s176
      %p182 = scmp.eq.s32.totalorder %s16, 0
      %p183 = por %p181, %p182
      %p184 = scmp.ne.s32.totalorder %s173, %s176
      %p185 = scmp.eq.s32.totalorder %s21, 1
      %p186 = por %p184, %p185
      %p187 = scmp.ne.s32.totalorder %s176, %s177
      %p188 = scmp.eq.s32.totalorder %s21, 0
      %p189 = por %p187, %p188
      %p190 = scmp.ne.s32.totalorder %s176, %s177
      %p191 = scmp.eq.s32.totalorder %s22, 1
      %p192 = por %p190, %p191
      %p194 = scmp.ne.s32.totalorder %s177, %s193
      %p195 = scmp.eq.s32.totalorder %s22, 0
      %p196 = por %p194, %p195
      %p197 = scmp.le.s32.totalorder 1, %s16
      %p198 = scmp.lt.s32.totalorder %s16, 3
      %p199 = pnand %p197, %p198
      %p200 = pneg %p199
      // Predicated region
      $region9: #{tpu_custom_call.1} parent=5 // pred_check
        _
      $region10: #{tpu_custom_call.1} parent=5 // pred_check_branch
        %202 = sbr.rel (%p199) target = $region12
      $region11: #{tpu_custom_call.1} parent=5 // pred_region
        %s203 = ssub.s32 %s16, 1
        // Predicated region
        $region13: #{tpu_custom_call.1} parent=11 // pred_check
          %p204 = pneg %p77
        $region14: #{tpu_custom_call.1} parent=11 // pred_check_branch
          %206 = sbr.rel (%p204) target = $region16
        $region15: #{tpu_custom_call.1} parent=11 // pred_region
          %s208 = ssub.s32 256, 256
          %209 = vsyncadd [#allocation5], %s208
          %s210 = sshll.u32 [#allocation4], 4
          %s211 = int_to_ptr.vmem [resolvable:$true] %s210
          %216 = dma.hbm_to_vmem [thread:$0]  %s1, 256, %s211, [#allocation5], 128, 128, 8
        $region16: #{tpu_custom_call.1} parent=11 // pred_fallthru
          _
        // Predicated region
        $region17: #{tpu_custom_call.1} parent=11 // pred_check
          %p217 = pneg %p98
        $region18: #{tpu_custom_call.1} parent=11 // pred_check_branch
          %219 = sbr.rel (%p217) target = $region20
        $region19: #{tpu_custom_call.1} parent=11 // pred_region
          _
        $region20: #{tpu_custom_call.1} parent=11 // pred_fallthru
          _
        // Predicated region
        $region21: #{tpu_custom_call.1} parent=11 // pred_check
          %p220 = pneg %p119
        $region22: #{tpu_custom_call.1} parent=11 // pred_check_branch
          %222 = sbr.rel (%p220) target = $region24
        $region23: #{tpu_custom_call.1} parent=11 // pred_region
          _
        $region24: #{tpu_custom_call.1} parent=11 // pred_fallthru
          _
        // Predicated region
        $region25: #{tpu_custom_call.1} parent=11 // pred_check
          %p223 = pneg %p140
        $region26: #{tpu_custom_call.1} parent=11 // pred_check_branch
          %225 = sbr.rel (%p223) target = $region28
        $region27: #{tpu_custom_call.1} parent=11 // pred_region
          _
        $region28: #{tpu_custom_call.1} parent=11 // pred_fallthru
          _
        // Predicated region
        $region29: #{tpu_custom_call.1} parent=11 // pred_check
          %p226 = pneg %p161
        $region30: #{tpu_custom_call.1} parent=11 // pred_check_branch
          %228 = sbr.rel (%p226) target = $region32
        $region31: #{tpu_custom_call.1} parent=11 // pred_region
          _
        $region32: #{tpu_custom_call.1} parent=11 // pred_fallthru
          _
      $region12: #{tpu_custom_call.1} parent=5 // pred_fallthru
        _
      %p229 = scmp.lt.s32.totalorder %s16, 2
      // Predicated region
      $region33: #{tpu_custom_call.1} parent=5 // pred_check
        %p230 = pneg %p229
      $region34: #{tpu_custom_call.1} parent=5 // pred_check_branch
        %232 = sbr.rel (%p230) target = $region36
      $region35: #{tpu_custom_call.1} parent=5 // pred_region
        // Predicated region
        $region37: #{tpu_custom_call.1} parent=35 // pred_check
          %p233 = pneg %p50
        $region38: #{tpu_custom_call.1} parent=35 // pred_check_branch
          %235 = sbr.rel (%p233) target = $region40
        $region39: #{tpu_custom_call.1} parent=35 // pred_region
          %p236 = scmp.lt.s32.totalorder %s23, 1
          %s237 = scalar_select %p236, %s23, 1
          %p238 = scmp.lt.s32.totalorder %s24, 0
          %s239 = scalar_select %p238, %s24, 0
          %s240 = sadd.s32 %s239, %s237
          %s241 = smul.addr %s240, 8
          %s242 = scalar_lea.vmem %s0, %s241
        $region40: #{tpu_custom_call.1} parent=35 // pred_fallthru
          _
      $region36: #{tpu_custom_call.1} parent=5 // pred_fallthru
        _
      %p243 = scmp.le.s32.totalorder 1, %s16
      %p244 = scmp.lt.s32.totalorder %s16, 3
      %p245 = pnand %p243, %p244
      %p246 = pneg %p245
      // Predicated region
      $region41: #{tpu_custom_call.1} parent=5 // pred_check
        _
      $region42: #{tpu_custom_call.1} parent=5 // pred_check_branch
        %248 = sbr.rel (%p245) target = $region44
      $region43: #{tpu_custom_call.1} parent=5 // pred_region
        %s249 = ssub.s32 %s16, 1
        // Predicated region
        $region45: #{tpu_custom_call.1} parent=43 // pred_check
          %p250 = pneg %p77
        $region46: #{tpu_custom_call.1} parent=43 // pred_check_branch
          %252 = sbr.rel (%p250) target = $region48
        $region47: #{tpu_custom_call.1} parent=43 // pred_region
          %253 = dma.done [#allocation5], 256
        $region48: #{tpu_custom_call.1} parent=43 // pred_fallthru
          _
        %p254 = scmp.lt.s32.totalorder %s25, 1
        %s255 = scalar_select %p254, %s25, 1
        %p256 = scmp.lt.s32.totalorder %s26, 0
        %s257 = scalar_select %p256, %s26, 0
        %s258 = sadd.s32 %s257, %s255
        %s259 = smul.addr %s258, 8
        %s260 = scalar_lea.vmem %s0, %s259
        %p261 = pneg %p56
        %p262 = pneg %p53
        %p263 = pneg %p77
        %p264 = pneg %p74
        %p265 = pneg %p98
        %p266 = pneg %p95
        %p267 = pneg %p119
        %p268 = pneg %p116
        %p269 = pneg %p140
        %p270 = pneg %p137
        %p271 = pneg %p161
        %p272 = pneg %p158
        %p273 = pneg %p189
        %p274 = pneg %p186
        %s275 = sand.u32 %s176, 1
        %s276 = scalar_lea.sflag [#allocation6], %s275
        %s277 = sand.u32 %s176, 1
        %s278 = smul.addr %s277, 8
        %s279 = scalar_lea.vmem [#allocation7], %s278
        %p280 = scmp.lt.s32.totalorder %s25, 1
        %s281 = scalar_select %p280, %s25, 1
        %p282 = scmp.lt.s32.totalorder %s26, 0
        %s283 = scalar_select %p282, %s26, 0
        %s284 = sadd.s32 %s283, %s281
        %s285 = smul.addr %s284, 8
        %s286 = scalar_lea.vmem %s0, %s285
        %p287 = scmp.eq.s32.totalorder %s26, 0
        // Predicated region
        $region49: #{tpu_custom_call.1} parent=43 // pred_check
          %p288 = pneg %p287
        $region50: #{tpu_custom_call.1} parent=43 // pred_check_branch
          %290 = sbr.rel (%p288) target = $region52
        $region51: #{tpu_custom_call.1} parent=43 // pred_region
          %291 = vst [vmem:[#allocation2] sm:$0xff] 0.0
          %292 = vst [vmem:[#allocation3] sm:$0xff] 0.0
        $region52: #{tpu_custom_call.1} parent=43 // pred_fallthru
          _
        %v293 = vld [vmem:[%s286] sm:$0xff]
        %v294 = vlaneseq
        %v295 = vand.u32 %v294, 127
        %v296 = vld [vmem:[#allocation2] sm:$0xff]
        %297 = vrot.lane.b32.xlu0 %v293, 4
        %v298 = vpop.permute.xlu0 %297
        %299 = vrot.lane.b32.xlu0 %v296, 4
        %v300 = vpop.permute.xlu0 %299
        %vm301 = vcmp.ge.s32.totalorder %v295, 4
        %v302 = vsel %vm301, 1, 0
        %vm303 = vcmp.eq.s32.totalorder %v302, 1
        %v304 = vsel %vm303, %v298, %v300
        %305 = vrot.lane.b32.xlu0 %v293, 2
        %v306 = vpop.permute.xlu0 %305
        %307 = vrot.lane.b32.xlu0 %v296, 2
        %v308 = vpop.permute.xlu0 %307
        %vm309 = vcmp.ge.s32.totalorder %v295, 2
        %v310 = vsel %vm309, 1, 0
        %vm311 = vcmp.eq.s32.totalorder %v310, 1
        %v312 = vsel %vm311, %v306, %v308
        %v313 = vld [vmem:[#allocation4] sm:$0xff]
        %v314 = vld [vmem:[#allocation4 + $0x8] sm:$0xff]
        %vm315 = vcmask 195584
        %v317 = vsel %vm315, %v313, 0
        %v320 = vsel %vm315, %v314, 0
        %322 = vmatprep.subr.mxu0 0.0
        %323 = vmatpush1.msra.mxu0 %v304
        %324 = vmatprep.subr.mxu0 0.0
        %325 = vmatpush1.msra.mxu0 %v312
        %326 = vmatprep.subr.mxu0 0.0
        %327 = vmatpush1.msra.mxu0 %v293
        %328 = vmatprep.subr.mxu0 0.0
        %329 = vmatpush1.msra.mxu0 0.0
        %330 = vmatprep.subr.mxu0 0.0
        %331 = vmatpush1.msra.mxu0 0.0
        %332 = vmatprep.subr.mxu0 0.0
        %333 = vmatpush1.msra.mxu0 0.0
        %334 = vmatprep.subr.mxu0 0.0
        %335 = vmatpush1.msra.mxu0 0.0
        %336 = vmatprep.subr.mxu0 0.0
        %337 = vmatpush1.msra.mxu0 0.0
        %338 = vmatprep.subr.mxu0 0.0
        %339 = vmatpush1.msra.mxu0 0.0
        %340 = vmatprep.subr.mxu0 0.0
        %341 = vmatpush1.msra.mxu0 0.0
        %342 = vmatprep.subr.mxu0 0.0
        %343 = vmatpush1.msra.mxu0 0.0
        %344 = vmatprep.subr.mxu0 0.0
        %345 = vmatpush1.msra.mxu0 0.0
        %346 = vmatprep.subr.mxu0 0.0
        %347 = vmatpush1.msra.mxu0 0.0
        %348 = vmatprep.subr.mxu0 0.0
        %349 = vmatpush1.msra.mxu0 0.0
        %350 = vmatprep.subr.mxu0 0.0
        %351 = vmatpush1.msra.mxu0 0.0
        %352 = vmatprep.subr.mxu0 0.0
        %353 = vmatpush1.msra.mxu0 0.0
        %354 = vmatprep.subr.mxu0 0.0
        %355 = vmatpush1.msra.mxu0 0.0
        %356 = vmatprep.subr.mxu0 0.0
        %357 = vmatpush1.msra.mxu0 0.0
        %358 = vmatprep.subr.mxu0 0.0
        %359 = vmatpush1.msra.mxu0 0.0
        %360 = vmatprep.subr.mxu0 0.0
        %361 = vmatpush1.msra.mxu0 0.0
        %362 = vmatprep.subr.mxu0 0.0
        %363 = vmatpush1.msra.mxu0 0.0
        %364 = vmatprep.subr.mxu0 0.0
        %365 = vmatpush1.msra.mxu0 0.0
        %366 = vmatprep.subr.mxu0 0.0
        %367 = vmatpush1.msra.mxu0 0.0
        %368 = vmatprep.subr.mxu0 0.0
        %369 = vmatpush1.msra.mxu0 0.0
        %370 = vmatprep.subr.mxu0 0.0
        %371 = vmatpush1.msra.mxu0 0.0
        %372 = vmatprep.subr.mxu0 0.0
        %373 = vmatpush1.msra.mxu0 0.0
        %374 = vmatprep.subr.mxu0 0.0
        %375 = vmatpush1.msra.mxu0 0.0
        %376 = vmatprep.subr.mxu0 0.0
        %377 = vmatpush1.msra.mxu0 0.0
        %378 = vmatprep.subr.mxu0 0.0
        %379 = vmatpush1.msra.mxu0 0.0
        %380 = vmatprep.subr.mxu0 0.0
        %381 = vmatpush1.msra.mxu0 0.0
        %382 = vmatprep.subr.mxu0 0.0
        %383 = vmatpush1.msra.mxu0 0.0
        %384 = vmatprep.subr.mxu0 0.0
        %385 = vmatpush1.msra.mxu0 0.0
        %386 = vmatprep.mubr.f32.mxu0 0.0
        %387 = vmatmul.mubr.f32.gmra.mrb[0].mxu0 %v317
        %v388 = vpop.f32.mrb[0].mxu0
        %v389 = vadd.f32 0.0, %v388
        %v390 = vpop.f32.mrb[0].mxu0
        %391 = vmatprep.mubr.f32.mxu0 0.0
        %392 = vmatmul.mubr.f32.gmra.mrb[0].mxu0 %v320
        %v393 = vpop.f32.mrb[0].mxu0
        %v394 = vadd.f32 0.0, %v393
        %v395 = vpop.f32.mrb[0].mxu0
        %396 = vdwg.mxu0
        %v397 = vld [vmem:[%s2] sm:$0xff]
        %399 = vset.pattern.permute.xlu0 0
        %400 = vperm.xlu0 %399, %v397
        %v401 = vpop.permute.xlu0 %400
        %v403 = vadd.f32 %v389, %v401
        %v404 = vmax.f32 %v403, 0.0
        %v405 = vld [vmem:[#allocation3] sm:$0xff]
        %406 = vrot.lane.b32.xlu0 %v404, 4
        %v407 = vpop.permute.xlu0 %406
        %408 = vrot.lane.b32.xlu0 %v405, 4
        %v409 = vpop.permute.xlu0 %408
        %v410 = vsel %vm303, %v407, %v409
        %411 = vrot.lane.b32.xlu0 %v404, 2
        %v412 = vpop.permute.xlu0 %411
        %413 = vrot.lane.b32.xlu0 %v405, 2
        %v414 = vpop.permute.xlu0 %413
        %v415 = vsel %vm311, %v412, %v414
        %v416 = vld [vmem:[%s3] sm:$0xff]
        %v417 = vld [vmem:[%s4] sm:$0xff]
        %419 = vset.pattern.permute.xlu0 0
        %420 = vperm.xlu0 %419, %v417
        %v421 = vpop.permute.xlu0 %420
        %v424 = vsel %vm315, %v416, 0
        %426 = vmatprep.subr.mxu0 0.0
        %427 = vmatpush1.msra.mxu0 %v410
        %428 = vmatprep.subr.mxu0 0.0
        %429 = vmatpush1.msra.mxu0 %v415
        %430 = vmatprep.subr.mxu0 0.0
        %431 = vmatpush1.msra.mxu0 %v404
        %432 = vmatprep.subr.mxu0 0.0
        %433 = vmatpush1.msra.mxu0 0.0
        %434 = vmatprep.subr.mxu0 0.0
        %435 = vmatpush1.msra.mxu0 0.0
        %436 = vmatprep.subr.mxu0 0.0
        %437 = vmatpush1.msra.mxu0 0.0
        %438 = vmatprep.subr.mxu0 0.0
        %439 = vmatpush1.msra.mxu0 0.0
        %440 = vmatprep.subr.mxu0 0.0
        %441 = vmatpush1.msra.mxu0 0.0
        %442 = vmatprep.subr.mxu0 0.0
        %443 = vmatpush1.msra.mxu0 0.0
        %444 = vmatprep.subr.mxu0 0.0
        %445 = vmatpush1.msra.mxu0 0.0
        %446 = vmatprep.subr.mxu0 0.0
        %447 = vmatpush1.msra.mxu0 0.0
        %448 = vmatprep.subr.mxu0 0.0
        %449 = vmatpush1.msra.mxu0 0.0
        %450 = vmatprep.subr.mxu0 0.0
        %451 = vmatpush1.msra.mxu0 0.0
        %452 = vmatprep.subr.mxu0 0.0
        %453 = vmatpush1.msra.mxu0 0.0
        %454 = vmatprep.subr.mxu0 0.0
        %455 = vmatpush1.msra.mxu0 0.0
        %456 = vmatprep.subr.mxu0 0.0
        %457 = vmatpush1.msra.mxu0 0.0
        %458 = vmatprep.subr.mxu0 0.0
        %459 = vmatpush1.msra.mxu0 0.0
        %460 = vmatprep.subr.mxu0 0.0
        %461 = vmatpush1.msra.mxu0 0.0
        %462 = vmatprep.subr.mxu0 0.0
        %463 = vmatpush1.msra.mxu0 0.0
        %464 = vmatprep.subr.mxu0 0.0
        %465 = vmatpush1.msra.mxu0 0.0
        %466 = vmatprep.subr.mxu0 0.0
        %467 = vmatpush1.msra.mxu0 0.0
        %468 = vmatprep.subr.mxu0 0.0
        %469 = vmatpush1.msra.mxu0 0.0
        %470 = vmatprep.subr.mxu0 0.0
        %471 = vmatpush1.msra.mxu0 0.0
        %472 = vmatprep.subr.mxu0 0.0
        %473 = vmatpush1.msra.mxu0 0.0
        %474 = vmatprep.subr.mxu0 0.0
        %475 = vmatpush1.msra.mxu0 0.0
        %476 = vmatprep.subr.mxu0 0.0
        %477 = vmatpush1.msra.mxu0 0.0
        %478 = vmatprep.subr.mxu0 0.0
        %479 = vmatpush1.msra.mxu0 0.0
        %480 = vmatprep.subr.mxu0 0.0
        %481 = vmatpush1.msra.mxu0 0.0
        %482 = vmatprep.subr.mxu0 0.0
        %483 = vmatpush1.msra.mxu0 0.0
        %484 = vmatprep.subr.mxu0 0.0
        %485 = vmatpush1.msra.mxu0 0.0
        %486 = vmatprep.subr.mxu0 0.0
        %487 = vmatpush1.msra.mxu0 0.0
        %488 = vmatprep.subr.mxu0 0.0
        %489 = vmatpush1.msra.mxu0 0.0
        %490 = vmatprep.mubr.f32.mxu0 0.0
        %491 = vmatmul.mubr.f32.gmra.mrb[0].mxu0 %v424
        %v492 = vpop.f32.mrb[0].mxu0
        %v493 = vadd.f32 %v421, %v492
        %v494 = vpop.f32.mrb[0].mxu0
        %495 = vdwg.mxu0
        %v496 = vmax.f32 %v493, 0.0
        %v497 = vld [vmem:[%s5] sm:$0xff]
        %499 = vset.pattern.permute.xlu0 0
        %500 = vperm.xlu0 %499, %v497
        %v501 = vpop.permute.xlu0 %500
        %v503 = vadd.f32 %v394, %v501
        %v504 = vadd.f32 %v496, %v503
        %505 = vst [vmem:[%s279] sm:$0xff] %v504
        %506 = vst [vmem:[#allocation2] sm:$0xff] %v293
        %507 = vst [vmem:[#allocation3] sm:$0xff] %v404
        %s508 = sand.u32 %s176, 1
        %s509 = scalar_lea.sflag [#allocation6], %s508
        %s510 = sand.u32 %s176, 1
        %s511 = smul.addr %s510, 8
        %s512 = scalar_lea.vmem [#allocation7], %s511
        // Predicated region
        $region53: #{tpu_custom_call.1} parent=43 // pred_check
          %p513 = pneg %p186
        $region54: #{tpu_custom_call.1} parent=43 // pred_check_branch
          %515 = sbr.rel (%p513) target = $region56
        $region55: #{tpu_custom_call.1} parent=43 // pred_region
          %s517 = ssub.s32 128, 128
          %518 = vsyncadd %s509, %s517
          %s519 = sadd.s32 %s26, %s25
          %s520 = smul.addr %s519, 128
          %s521 = scalar_lea.hbm %s6, %s520
          %s523 = sshll.u32 %s512, 4
          %s524 = int_to_ptr.vmem [resolvable:$true] %s523
          %526 = dma.vmem_to_hbm [thread:$0]  %s524, 128, %s521, %s509
        $region56: #{tpu_custom_call.1} parent=43 // pred_fallthru
          _
      $region44: #{tpu_custom_call.1} parent=5 // pred_fallthru
        _
      %p527 = scmp.le.s32.totalorder 2, %s16
      // Predicated region
      $region57: #{tpu_custom_call.1} parent=5 // pred_check
        %p528 = pneg %p527
      $region58: #{tpu_custom_call.1} parent=5 // pred_check_branch
        %530 = sbr.rel (%p528) target = $region60
      $region59: #{tpu_custom_call.1} parent=5 // pred_region
        %s531 = ssub.s32 %s16, 2
        // Predicated region
        $region61: #{tpu_custom_call.1} parent=59 // pred_check
          %p532 = pneg %p192
        $region62: #{tpu_custom_call.1} parent=59 // pred_check_branch
          %534 = sbr.rel (%p532) target = $region64
        $region63: #{tpu_custom_call.1} parent=59 // pred_region
          %s535 = sand.u32 %s177, 1
          %s536 = scalar_lea.sflag [#allocation6], %s535
          %s537 = sand.u32 %s177, 1
          %s538 = smul.addr %s537, 8
          %s539 = scalar_lea.vmem [#allocation7], %s538
          %540 = dma.done %s536, 128
        $region64: #{tpu_custom_call.1} parent=59 // pred_fallthru
          _
      $region60: #{tpu_custom_call.1} parent=5 // pred_fallthru
        _
    $region6: #{tpu_custom_call.1} parent=1 // loop_footer
      %s20 = sadd.s32 1, %s16
    $region7: #{tpu_custom_call.1} parent=1 // loop_footer_branch
      %15 = sbr.rel target = $region3
    $region8: #{tpu_custom_call.1} parent=1 // loop_exit
      _
    %541 = vsyncpa [#allocation5], 1
    %s542 = scalar_lea.sflag [#allocation5], 1
    %543 = vsyncpa %s542, 1
    %544 = vsyncpa [#allocation6], 1
    %s545 = scalar_lea.sflag [#allocation6], 1
    %546 = vsyncpa %s545, 1

</llo_original>
